<compile_context>
chip_gen: v5e
topology: v5e:2x2
jax: 0.10.0
libtpu: 0.0.40
codegen_flags: <defaults>
</compile_context>

<pallas_src>
import functools

import jax
import jax.numpy as jnp
from jax.experimental import pallas as pl
from jax.experimental.pallas import tpu as pltpu


def _round_up(x, m):
    return (x + m - 1) // m * m


# --------------------------------------------------------------------------
# Fast path: full weight resident in VMEM, 1-D grid over row tiles.
# --------------------------------------------------------------------------
def relu_layer_kernel_resident(x_ref, w_ref, b_ref, o_ref):
    y = jnp.dot(x_ref[...], w_ref[...], preferred_element_type=jnp.float32)
    y = y + b_ref[...]                                   # (tm, M) + (1, M), f32
    o_ref[...] = jnp.maximum(y, 0.1 * y).astype(o_ref.dtype)   # leaky_relu(0.1)


# --------------------------------------------------------------------------
# General path: 3-D tiled grid (j, i, k) with f32 accumulator scratch.
# --------------------------------------------------------------------------
def relu_layer_kernel_tiled(x_ref, w_ref, b_ref, o_ref, acc_ref):
    k = pl.program_id(2)

    @pl.when(k == 0)
    def _():
        acc_ref[...] = jnp.zeros_like(acc_ref)

    acc_ref[...] += jnp.dot(
        x_ref[...], w_ref[...], preferred_element_type=jnp.float32
    )

    @pl.when(k == pl.num_programs(2) - 1)
    def _():
        y = acc_ref[...] + b_ref[...]
        o_ref[...] = jnp.maximum(y, 0.1 * y).astype(o_ref.dtype)


@functools.partial(jax.jit, static_argnames=("compute_dtype",))
def relu_layer(x, weight, bias, compute_dtype=jnp.bfloat16):
    """Fused Linear + LeakyReLU(0.1).

    x:      [N, K] f32 (batch, in_features)
    weight: [M, K] f32 (PyTorch nn.Linear layout: out_features, in_features)
    bias:   [M]    f32
    returns [N, M] f32
    """
    N, K = x.shape
    M, K2 = weight.shape
    assert K == K2

    itemsize = jnp.dtype(compute_dtype).itemsize

    # Padded (lane-dense / sublane-aligned) problem dims.
    K_p = _round_up(K, 128)
    M_p = _round_up(M, 128)

    # Row tile on the streamed (batch) axis: big tiles amortize per-step
    # overhead; multiple of 16 covers bf16 sublane packing.
    tm = 512 if N >= 512 else _round_up(N, 16)
    N_p = _round_up(N, tm)

    # --- wrapper-side layout plumbing: pad, transpose weight to [K, M],
    # --- cast matmul operands to bf16 (bias stays f32 for the f32 epilogue).
    x_p = jnp.zeros((N_p, K_p), compute_dtype).at[:N, :K].set(
        x.astype(compute_dtype))
    w_p = jnp.zeros((K_p, M_p), compute_dtype).at[:K, :M].set(
        weight.T.astype(compute_dtype))
    b_p = jnp.zeros((1, M_p), jnp.float32).at[0, :M].set(
        bias.astype(jnp.float32))

    weight_bytes = K_p * M_p * itemsize
    # Per-step VMEM (double-buffered x & out tiles + resident weight/bias):
    #   2*tm*K_p*2 + 2*tm*M_p*4 + K_p*M_p*2 + small
    use_resident = (
        weight_bytes <= 8 * 1024 * 1024
        and (2 * tm * K_p * itemsize + 2 * tm * M_p * 4 + weight_bytes)
        <= 24 * 1024 * 1024
    )

    if use_resident:
        ni = N_p // tm
        out_p = pl.pallas_call(
            relu_layer_kernel_resident,
            out_shape=jax.ShapeDtypeStruct((N_p, M_p), x.dtype),
            grid=(ni,),
            in_specs=[
                pl.BlockSpec((tm, K_p), lambda i: (i, 0)),    # activations: streamed
                pl.BlockSpec((K_p, M_p), lambda i: (0, 0)),   # weight: resident
                pl.BlockSpec((1, M_p), lambda i: (0, 0)),     # bias: resident
            ],
            out_specs=pl.BlockSpec((tm, M_p), lambda i: (i, 0)),
            compiler_params=pltpu.CompilerParams(
                dimension_semantics=("parallel",),
                vmem_limit_bytes=48 * 1024 * 1024,
            ),
        )(x_p, w_p, b_p)
        return out_p[:N, :M]

    # ---------------- general tiled fallback (large weights) ----------------
    tn = 256 if M_p >= 256 else M_p
    tk = 512 if K_p >= 512 else K_p
    M_pp = _round_up(M_p, tn)
    K_pp = _round_up(K_p, tk)
    if M_pp != M_p:
        w_p = jnp.zeros((K_p, M_pp), compute_dtype).at[:, :M_p].set(w_p)
        b_p = jnp.zeros((1, M_pp), jnp.float32).at[:, :M_p].set(b_p)
        M_p = M_pp
    if K_pp != K_p:
        x_p = jnp.zeros((N_p, K_pp), compute_dtype).at[:, :K_p].set(x_p)
        w_p = jnp.zeros((K_pp, M_p), compute_dtype).at[:K_p, :].set(w_p)
        K_p = K_pp

    nj, ni, nk = M_p // tn, N_p // tm, K_p // tk

    out_p = pl.pallas_call(
        relu_layer_kernel_tiled,
        out_shape=jax.ShapeDtypeStruct((N_p, M_p), x.dtype),
        # j outermost so the (k, j) weight tile keeps the same block index
        # across every row tile i -> loaded once and kept resident in VMEM.
        grid=(nj, ni, nk),
        in_specs=[
            pl.BlockSpec((tm, tk), lambda j, i, k: (i, k)),   # activations
            pl.BlockSpec((tk, tn), lambda j, i, k: (k, j)),   # weight
            pl.BlockSpec((1, tn), lambda j, i, k: (0, j)),    # bias
        ],
        out_specs=pl.BlockSpec((tm, tn), lambda j, i, k: (i, j)),
        scratch_shapes=[pltpu.VMEM((tm, tn), jnp.float32)],
        compiler_params=pltpu.CompilerParams(
            dimension_semantics=("parallel", "parallel", "arbitrary"),
            vmem_limit_bytes=48 * 1024 * 1024,
        ),
    )(x_p, w_p, b_p)

    return out_p[:N, :M]


def init_relu_layer_params(key, in_features, out_features, omega_0=30):
    """Deterministic init matching ReLULayer.__init__ semantics.

    weight ~ U(-1/(omega_0*in_features), 1/(omega_0*in_features))  (omega_0 > 1)
    bias   ~ U(-1/sqrt(in_features), 1/sqrt(in_features))          (nn.Linear default)
    """
    kw, kb = jax.random.split(key)
    w_bound = 1.0 / (omega_0 * in_features)
    weight = jax.random.uniform(
        kw, (out_features, in_features), jnp.float32, -w_bound, w_bound
    )
    b_bound = 1.0 / (in_features ** 0.5)
    bias = jax.random.uniform(
        kb, (out_features,), jnp.float32, -b_bound, b_bound
    )
    return weight, bias


if __name__ == "__main__":
    key = jax.random.PRNGKey(0)
    k_x, k_p = jax.random.split(key)

    # SIREN-style coordinate batch through one hidden ReLULayer.
    batch = 256
    in_features = 32
    out_features = 64
    omega_0 = 30

    x = jax.random.normal(k_x, (batch, in_features), jnp.float32)
    weight, bias = init_relu_layer_params(k_p, in_features, out_features, omega_0)

    out = relu_layer(x, weight, bias)
    jax.block_until_ready(out)
    assert out.shape == (batch, out_features)

    # Reference matching the kernel's numerics (bf16 operands, f32 accumulate).
    ref = jnp.dot(x.astype(jnp.bfloat16), weight.T.astype(jnp.bfloat16),
                  preferred_element_type=jnp.float32) + bias
    ref = jnp.maximum(ref, 0.1 * ref)
    assert jnp.allclose(out, ref, atol=1e-4, rtol=1e-4)

    # Loose sanity check against the exact f32 module semantics
    # (F.leaky_relu(linear(x), 0.1)).
    ref_f32 = x @ weight.T + bias
    ref_f32 = jnp.where(ref_f32 >= 0, ref_f32, 0.1 * ref_f32)
    assert jnp.allclose(out, ref_f32, atol=5e-3, rtol=5e-2)

    print("KERNEL_OK")
</pallas_src>

<mosaic_0001>
module attributes {stable_mosaic.version = 11 : i64} {
  func.func @relu_layer_kernel_resident(%arg0: i32, %arg1: memref<256x128xbf16, #tpu.memory_space<vmem>>, %arg2: memref<128x128xbf16, #tpu.memory_space<vmem>>, %arg3: memref<1x128xf32, #tpu.memory_space<vmem>>, %arg4: memref<256x128xf32, #tpu.memory_space<vmem>>) attributes {dimension_semantics = [#tpu.dimension_semantics<parallel>], iteration_bounds = array<i64: 1>, scalar_prefetch = 0 : i64, scratch_operands = 0 : i64, tpu.core_type = #tpu.core_type<tc>, window_params = [{transform_indices = @transform_0, window_bounds = array<i64: 256, 128>}, {pipeline_mode = #tpu.pipeline_mode<synchronous>, transform_indices = @transform_1, window_bounds = array<i64: 128, 128>}, {pipeline_mode = #tpu.pipeline_mode<synchronous>, transform_indices = @transform_2, window_bounds = array<i64: 1, 128>}, {transform_indices = @transform_3, window_bounds = array<i64: 256, 128>}]} {
    %c0 = arith.constant 0 : index
    %c0_0 = arith.constant 0 : index
    %0 = vector.load %arg1[%c0, %c0_0] : memref<256x128xbf16, #tpu.memory_space<vmem>>, vector<256x128xbf16>
    %c0_1 = arith.constant 0 : index
    %c0_2 = arith.constant 0 : index
    %1 = vector.load %arg2[%c0_1, %c0_2] : memref<128x128xbf16, #tpu.memory_space<vmem>>, vector<128x128xbf16>
    %cst = arith.constant dense<0.000000e+00> : vector<256x128xf32>
    %2 = tpu.matmul %0, %1, %cst {dimension_numbers = #tpu.dot_dimension_numbers<[1], [0], [0], [1], [0, 0, 1, 1], [], []>} : vector<256x128xbf16>, vector<128x128xbf16>, vector<256x128xf32> -> vector<256x128xf32>
    %c0_3 = arith.constant 0 : index
    %c0_4 = arith.constant 0 : index
    %3 = vector.load %arg3[%c0_3, %c0_4] : memref<1x128xf32, #tpu.memory_space<vmem>>, vector<1x128xf32>
    %4 = vector.broadcast %3 : vector<1x128xf32> to vector<256x128xf32>
    %5 = arith.addf %2, %4 : vector<256x128xf32>
    %cst_5 = arith.constant 1.000000e-01 : f32
    %6 = vector.broadcast %cst_5 : f32 to vector<256x128xf32>
    %7 = arith.mulf %6, %5 : vector<256x128xf32>
    %8 = arith.maximumf %5, %7 : vector<256x128xf32>
    %c0_6 = arith.constant 0 : index
    %c0_7 = arith.constant 0 : index
    %9 = vector.load %arg4[%c0_6, %c0_7] : memref<256x128xf32, #tpu.memory_space<vmem>>, vector<256x128xf32>
    tpu.vector_store %arg4[%c0_6, %c0_7], %8 {strides = array<i32>} : memref<256x128xf32, #tpu.memory_space<vmem>>, vector<256x128xf32>,
    return
  }
  func.func @transform_0(%arg0: i32) -> (i32, i32) {
    %c0_i32 = arith.constant 0 : i32
    %c0_i32_0 = arith.constant 0 : i32
    return %arg0, %c0_i32 : i32, i32
  }
  func.func @transform_1(%arg0: i32) -> (i32, i32) {
    %c0_i32 = arith.constant 0 : i32
    %c0_i32_0 = arith.constant 0 : i32
    %c0_i32_1 = arith.constant 0 : i32
    return %c0_i32, %c0_i32_0 : i32, i32
  }
  func.func @transform_2(%arg0: i32) -> (i32, i32) {
    %c0_i32 = arith.constant 0 : i32
    %c0_i32_0 = arith.constant 0 : i32
    %c0_i32_1 = arith.constant 0 : i32
    return %c0_i32, %c0_i32_0 : i32, i32
  }
  func.func @transform_3(%arg0: i32) -> (i32, i32) {
    %c0_i32 = arith.constant 0 : i32
    %c0_i32_0 = arith.constant 0 : i32
    return %arg0, %c0_i32 : i32, i32
  }
}

</mosaic_0001>

<llo_original>
// kernel: relu_layer.1
$region0: #{relu_layer.1}
  #allocation0 [shape = 'u32[]', space=smem, size = 0x4, offset = 0x4, fixed_abs, tag = 'smem constant byte address 0x4 - core index']
  #allocation1 [shape = 'u32[72,128]{1,0:T(1,128)}', space=vmem, size = 0x9000, scoped, tag = 'internal scratch']
  %s0 = inlined_call_operand.vmem [shape: bf16[256,128], index: 0, kind: input, shape index: {}]
  %s1 = inlined_call_operand.vmem [shape: bf16[128,128], index: 1, kind: input, shape index: {}]
  %s2 = inlined_call_operand.vmem [shape: f32[1,128], index: 2, kind: input, shape index: {}]
  %s3 = inlined_call_operand.vmem [shape: f32[256,128], index: 3, kind: output, shape index: {}]
  %s4 = sld [smem:[#allocation0]]
  $region22: #{relu_layer.1} parent=0
    _
  %s6 = ssub.s32 1, %s4
  %s7 = scalar_select 0, %s6, %s4
  // Predicated region
  $region2: #{relu_layer.1} parent=0 // pred_check
    _
  $region3: #{relu_layer.1} parent=0 // pred_check_branch
    %9 = sbr.rel (0) target = $region5
  $region4: #{relu_layer.1} parent=0 // pred_region
    _
  $region5: #{relu_layer.1} parent=0 // pred_fallthru
    _
  // Predicated region
  $region6: #{relu_layer.1} parent=0 // pred_check
    _
  $region7: #{relu_layer.1} parent=0 // pred_check_branch
    %11 = sbr.rel (0) target = $region9
  $region8: #{relu_layer.1} parent=0 // pred_region
    _
  $region9: #{relu_layer.1} parent=0 // pred_fallthru
    _
  // Predicated region
  $region10: #{relu_layer.1} parent=0 // pred_check
    _
  $region11: #{relu_layer.1} parent=0 // pred_check_branch
    %13 = sbr.rel (0) target = $region13
  $region12: #{relu_layer.1} parent=0 // pred_region
    _
  $region13: #{relu_layer.1} parent=0 // pred_fallthru
    _
  %v14 = vld [vmem:[%s0] sm:$0xf]
  %v15 = vld [vmem:[%s0 + $0x4] sm:$0xf]
  %v16 = vld [vmem:[%s0 + $0x8] sm:$0xf]
  %v17 = vld [vmem:[%s0 + $0xc] sm:$0xf]
  %v18 = vld [vmem:[%s0 + $0x10] sm:$0xf]
  %v19 = vld [vmem:[%s0 + $0x14] sm:$0xf]
  %v20 = vld [vmem:[%s0 + $0x18] sm:$0xf]
  %v21 = vld [vmem:[%s0 + $0x1c] sm:$0xf]
  %v22 = vld [vmem:[%s0 + $0x20] sm:$0xf]
  %v23 = vld [vmem:[%s0 + $0x24] sm:$0xf]
  %v24 = vld [vmem:[%s0 + $0x28] sm:$0xf]
  %v25 = vld [vmem:[%s0 + $0x2c] sm:$0xf]
  %v26 = vld [vmem:[%s0 + $0x30] sm:$0xf]
  %v27 = vld [vmem:[%s0 + $0x34] sm:$0xf]
  %v28 = vld [vmem:[%s0 + $0x38] sm:$0xf]
  %v29 = vld [vmem:[%s0 + $0x3c] sm:$0xf]
  %v30 = vld [vmem:[%s0 + $0x40] sm:$0xf]
  %v31 = vld [vmem:[%s0 + $0x44] sm:$0xf]
  %v32 = vld [vmem:[%s0 + $0x48] sm:$0xf]
  %v33 = vld [vmem:[%s0 + $0x4c] sm:$0xf]
  %v34 = vld [vmem:[%s0 + $0x50] sm:$0xf]
  %v35 = vld [vmem:[%s0 + $0x54] sm:$0xf]
  %v36 = vld [vmem:[%s0 + $0x58] sm:$0xf]
  %v37 = vld [vmem:[%s0 + $0x5c] sm:$0xf]
  %v38 = vld [vmem:[%s0 + $0x60] sm:$0xf]
  %v39 = vld [vmem:[%s0 + $0x64] sm:$0xf]
  %v40 = vld [vmem:[%s0 + $0x68] sm:$0xf]
  %v41 = vld [vmem:[%s0 + $0x6c] sm:$0xf]
  %v42 = vld [vmem:[%s0 + $0x70] sm:$0xf]
  %v43 = vld [vmem:[%s0 + $0x74] sm:$0xf]
  %v44 = vld [vmem:[%s0 + $0x78] sm:$0xf]
  %v45 = vld [vmem:[%s0 + $0x7c] sm:$0xf]
  %v46 = vld [vmem:[%s1] sm:$0xf]
  %v47 = vld [vmem:[%s1 + $0x4] sm:$0xf]
  %v48 = vld [vmem:[%s1 + $0x8] sm:$0xf]
  %v49 = vld [vmem:[%s1 + $0xc] sm:$0xf]
  %v50 = vld [vmem:[%s1 + $0x10] sm:$0xf]
  %v51 = vld [vmem:[%s1 + $0x14] sm:$0xf]
  %v52 = vld [vmem:[%s1 + $0x18] sm:$0xf]
  %v53 = vld [vmem:[%s1 + $0x1c] sm:$0xf]
  %v54 = vld [vmem:[%s1 + $0x20] sm:$0xf]
  %v55 = vld [vmem:[%s1 + $0x24] sm:$0xf]
  %v56 = vld [vmem:[%s1 + $0x28] sm:$0xf]
  %v57 = vld [vmem:[%s1 + $0x2c] sm:$0xf]
  %v58 = vld [vmem:[%s1 + $0x30] sm:$0xf]
  %v59 = vld [vmem:[%s1 + $0x34] sm:$0xf]
  %v60 = vld [vmem:[%s1 + $0x38] sm:$0xf]
  %v61 = vld [vmem:[%s1 + $0x3c] sm:$0xf]
  %v62 = vld [vmem:[%s2] sm:$0x1]
  %v64 = vperm.slane %v62, 0
  %v98 = vunpack.c.l.b16 %v14
  %v99 = vunpack.c.l.b16 %v15
  %v100 = vunpack.c.l.b16 %v16
  %v101 = vunpack.c.l.b16 %v17
  %v102 = vunpack.c.l.b16 %v18
  %v103 = vunpack.c.l.b16 %v19
  %v104 = vunpack.c.l.b16 %v20
  %v105 = vunpack.c.l.b16 %v21
  %v106 = vunpack.c.l.b16 %v22
  %v107 = vunpack.c.l.b16 %v23
  %v108 = vunpack.c.l.b16 %v24
  %v109 = vunpack.c.l.b16 %v25
  %v110 = vunpack.c.l.b16 %v26
  %v111 = vunpack.c.l.b16 %v27
  %v112 = vunpack.c.l.b16 %v28
  %v113 = vunpack.c.l.b16 %v29
  %v114 = vunpack.c.l.b16 %v30
  %v115 = vunpack.c.l.b16 %v31
  %v116 = vunpack.c.l.b16 %v32
  %v117 = vunpack.c.l.b16 %v33
  %v118 = vunpack.c.l.b16 %v34
  %v119 = vunpack.c.l.b16 %v35
  %v120 = vunpack.c.l.b16 %v36
  %v121 = vunpack.c.l.b16 %v37
  %v122 = vunpack.c.l.b16 %v38
  %v123 = vunpack.c.l.b16 %v39
  %v124 = vunpack.c.l.b16 %v40
  %v125 = vunpack.c.l.b16 %v41
  %v126 = vunpack.c.l.b16 %v42
  %v127 = vunpack.c.l.b16 %v43
  %v128 = vunpack.c.l.b16 %v44
  %v129 = vunpack.c.l.b16 %v45
  %v130 = vpack.c.b16 %v99, %v98
  %v131 = vpack.c.b16 %v101, %v100
  %v132 = vpack.c.b16 %v103, %v102
  %v133 = vpack.c.b16 %v105, %v104
  %v134 = vpack.c.b16 %v107, %v106
  %v135 = vpack.c.b16 %v109, %v108
  %v136 = vpack.c.b16 %v111, %v110
  %v137 = vpack.c.b16 %v113, %v112
  %v138 = vpack.c.b16 %v115, %v114
  %v139 = vpack.c.b16 %v117, %v116
  %v140 = vpack.c.b16 %v119, %v118
  %v141 = vpack.c.b16 %v121, %v120
  %v142 = vpack.c.b16 %v123, %v122
  %v143 = vpack.c.b16 %v125, %v124
  %v144 = vpack.c.b16 %v127, %v126
  %v145 = vpack.c.b16 %v129, %v128
  %v178 = vunpack.c.l.b16 %v46
  %v179 = vunpack.c.l.b16 %v47
  %v180 = vunpack.c.l.b16 %v48
  %v181 = vunpack.c.l.b16 %v49
  %v182 = vunpack.c.l.b16 %v50
  %v183 = vunpack.c.l.b16 %v51
  %v184 = vunpack.c.l.b16 %v52
  %v185 = vunpack.c.l.b16 %v53
  %v186 = vunpack.c.l.b16 %v54
  %v187 = vunpack.c.l.b16 %v55
  %v188 = vunpack.c.l.b16 %v56
  %v189 = vunpack.c.l.b16 %v57
  %v190 = vunpack.c.l.b16 %v58
  %v191 = vunpack.c.l.b16 %v59
  %v192 = vunpack.c.l.b16 %v60
  %v193 = vunpack.c.l.b16 %v61
  %v194 = vpack.c.b16 %v179, %v178
  %v195 = vpack.c.b16 %v181, %v180
  %v196 = vpack.c.b16 %v183, %v182
  %v197 = vpack.c.b16 %v185, %v184
  %v198 = vpack.c.b16 %v187, %v186
  %v199 = vpack.c.b16 %v189, %v188
  %v200 = vpack.c.b16 %v191, %v190
  %v201 = vpack.c.b16 %v193, %v192
  %210 = vmatpush.bf16.msra.mxu0 %v201
  %211 = vmatpush.bf16.msra.mxu0 %v200
  %212 = vmatpush.bf16.msra.mxu0 %v199
  %213 = vmatpush.bf16.msra.mxu0 %v198
  %214 = vmatpush.bf16.msra.mxu0 %v197
  %215 = vmatpush.bf16.msra.mxu0 %v196
  %216 = vmatpush.bf16.msra.mxu0 %v195
  %217 = vmatpush.bf16.msra.mxu0 %v194
  %218 = vmatmul.bf16.gmra.mxu0 %v130
  %v219 = vpop.f32.mrf.mxu0
  %v220 = vadd.f32 %v64, %v219
  %v221 = vpop.f32.mrf.mxu0
  %v222 = vadd.f32 %v64, %v221
  %223 = vmatmul.bf16.gmra.mxu0 %v131
  %v224 = vpop.f32.mrf.mxu0
  %v225 = vadd.f32 %v64, %v224
  %v226 = vpop.f32.mrf.mxu0
  %v227 = vadd.f32 %v64, %v226
  %228 = vmatmul.bf16.gmra.mxu0 %v132
  %v229 = vpop.f32.mrf.mxu0
  %v230 = vadd.f32 %v64, %v229
  %v231 = vpop.f32.mrf.mxu0
  %v232 = vadd.f32 %v64, %v231
  %233 = vmatmul.bf16.gmra.mxu0 %v133
  %v234 = vpop.f32.mrf.mxu0
  %v235 = vadd.f32 %v64, %v234
  %v236 = vpop.f32.mrf.mxu0
  %v237 = vadd.f32 %v64, %v236
  %238 = vmatmul.bf16.gmra.mxu0 %v134
  %v239 = vpop.f32.mrf.mxu0
  %v240 = vadd.f32 %v64, %v239
  %v241 = vpop.f32.mrf.mxu0
  %v242 = vadd.f32 %v64, %v241
  %243 = vmatmul.bf16.gmra.mxu0 %v135
  %v244 = vpop.f32.mrf.mxu0
  %v245 = vadd.f32 %v64, %v244
  %v246 = vpop.f32.mrf.mxu0
  %v247 = vadd.f32 %v64, %v246
  %248 = vmatmul.bf16.gmra.mxu0 %v136
  %v249 = vpop.f32.mrf.mxu0
  %v250 = vadd.f32 %v64, %v249
  %v251 = vpop.f32.mrf.mxu0
  %v252 = vadd.f32 %v64, %v251
  %253 = vmatmul.bf16.gmra.mxu0 %v137
  %v254 = vpop.f32.mrf.mxu0
  %v255 = vadd.f32 %v64, %v254
  %v256 = vpop.f32.mrf.mxu0
  %v257 = vadd.f32 %v64, %v256
  %258 = vmatmul.bf16.gmra.mxu0 %v138
  %v259 = vpop.f32.mrf.mxu0
  %v260 = vadd.f32 %v64, %v259
  %v261 = vpop.f32.mrf.mxu0
  %v262 = vadd.f32 %v64, %v261
  %263 = vmatmul.bf16.gmra.mxu0 %v139
  %v264 = vpop.f32.mrf.mxu0
  %v265 = vadd.f32 %v64, %v264
  %v266 = vpop.f32.mrf.mxu0
  %v267 = vadd.f32 %v64, %v266
  %268 = vmatmul.bf16.gmra.mxu0 %v140
  %v269 = vpop.f32.mrf.mxu0
  %v270 = vadd.f32 %v64, %v269
  %v271 = vpop.f32.mrf.mxu0
  %v272 = vadd.f32 %v64, %v271
  %273 = vmatmul.bf16.gmra.mxu0 %v141
  %v274 = vpop.f32.mrf.mxu0
  %v275 = vadd.f32 %v64, %v274
  %v276 = vpop.f32.mrf.mxu0
  %v277 = vadd.f32 %v64, %v276
  %278 = vmatmul.bf16.gmra.mxu0 %v142
  %v279 = vpop.f32.mrf.mxu0
  %v280 = vadd.f32 %v64, %v279
  %v281 = vpop.f32.mrf.mxu0
  %v282 = vadd.f32 %v64, %v281
  %283 = vmatmul.bf16.gmra.mxu0 %v143
  %v284 = vpop.f32.mrf.mxu0
  %v285 = vadd.f32 %v64, %v284
  %v286 = vpop.f32.mrf.mxu0
  %v287 = vadd.f32 %v64, %v286
  %288 = vmatmul.bf16.gmra.mxu0 %v144
  %v289 = vpop.f32.mrf.mxu0
  %v290 = vadd.f32 %v64, %v289
  %v291 = vpop.f32.mrf.mxu0
  %v292 = vadd.f32 %v64, %v291
  %293 = vmatmul.bf16.gmra.mxu0 %v145
  %v294 = vpop.f32.mrf.mxu0
  %v295 = vadd.f32 %v64, %v294
  %v296 = vpop.f32.mrf.mxu0
  %v297 = vadd.f32 %v64, %v296
  %298 = vdwg.mxu0
  %v299 = vmul.f32 %v220, 0.1
  %v300 = vmul.f32 %v222, 0.1
  %v301 = vmul.f32 %v225, 0.1
  %v302 = vmul.f32 %v227, 0.1
  %v303 = vmul.f32 %v230, 0.1
  %v304 = vmul.f32 %v232, 0.1
  %v305 = vmul.f32 %v235, 0.1
  %v306 = vmul.f32 %v237, 0.1
  %v307 = vmul.f32 %v240, 0.1
  %v308 = vmul.f32 %v242, 0.1
  %v309 = vmul.f32 %v245, 0.1
  %v310 = vmul.f32 %v247, 0.1
  %v311 = vmul.f32 %v250, 0.1
  %v312 = vmul.f32 %v252, 0.1
  %v313 = vmul.f32 %v255, 0.1
  %v314 = vmul.f32 %v257, 0.1
  %v315 = vmul.f32 %v260, 0.1
  %v316 = vmul.f32 %v262, 0.1
  %v317 = vmul.f32 %v265, 0.1
  %v318 = vmul.f32 %v267, 0.1
  %v319 = vmul.f32 %v270, 0.1
  %v320 = vmul.f32 %v272, 0.1
  %v321 = vmul.f32 %v275, 0.1
  %v322 = vmul.f32 %v277, 0.1
  %v323 = vmul.f32 %v280, 0.1
  %v324 = vmul.f32 %v282, 0.1
  %v325 = vmul.f32 %v285, 0.1
  %v326 = vmul.f32 %v287, 0.1
  %v327 = vmul.f32 %v290, 0.1
  %v328 = vmul.f32 %v292, 0.1
  %v329 = vmul.f32 %v295, 0.1
  %v330 = vmul.f32 %v297, 0.1
  %v331 = vmax.f32 %v220, %v299
  %v332 = vmax.f32 %v222, %v300
  %v333 = vmax.f32 %v225, %v301
  %v334 = vmax.f32 %v227, %v302
  %v335 = vmax.f32 %v230, %v303
  %v336 = vmax.f32 %v232, %v304
  %v337 = vmax.f32 %v235, %v305
  %v338 = vmax.f32 %v237, %v306
  %v339 = vmax.f32 %v240, %v307
  %v340 = vmax.f32 %v242, %v308
  %v341 = vmax.f32 %v245, %v309
  %v342 = vmax.f32 %v247, %v310
  %v343 = vmax.f32 %v250, %v311
  %v344 = vmax.f32 %v252, %v312
  %v345 = vmax.f32 %v255, %v313
  %v346 = vmax.f32 %v257, %v314
  %v347 = vmax.f32 %v260, %v315
  %v348 = vmax.f32 %v262, %v316
  %v349 = vmax.f32 %v265, %v317
  %v350 = vmax.f32 %v267, %v318
  %v351 = vmax.f32 %v270, %v319
  %v352 = vmax.f32 %v272, %v320
  %v353 = vmax.f32 %v275, %v321
  %v354 = vmax.f32 %v277, %v322
  %v355 = vmax.f32 %v280, %v323
  %v356 = vmax.f32 %v282, %v324
  %v357 = vmax.f32 %v285, %v325
  %v358 = vmax.f32 %v287, %v326
  %v359 = vmax.f32 %v290, %v327
  %v360 = vmax.f32 %v292, %v328
  %v361 = vmax.f32 %v295, %v329
  %v362 = vmax.f32 %v297, %v330
  %363 = vst [vmem:[%s3] sm:$0xff] %v331
  %364 = vst [vmem:[%s3 + $0x8] sm:$0xff] %v332
  %365 = vst [vmem:[%s3 + $0x10] sm:$0xff] %v333
  %366 = vst [vmem:[%s3 + $0x18] sm:$0xff] %v334
  %367 = vst [vmem:[%s3 + $0x20] sm:$0xff] %v335
  %368 = vst [vmem:[%s3 + $0x28] sm:$0xff] %v336
  %369 = vst [vmem:[%s3 + $0x30] sm:$0xff] %v337
  %370 = vst [vmem:[%s3 + $0x38] sm:$0xff] %v338
  %371 = vst [vmem:[%s3 + $0x40] sm:$0xff] %v339
  %372 = vst [vmem:[%s3 + $0x48] sm:$0xff] %v340
  %373 = vst [vmem:[%s3 + $0x50] sm:$0xff] %v341
  %374 = vst [vmem:[%s3 + $0x58] sm:$0xff] %v342
  %375 = vst [vmem:[%s3 + $0x60] sm:$0xff] %v343
  %376 = vst [vmem:[%s3 + $0x68] sm:$0xff] %v344
  %377 = vst [vmem:[%s3 + $0x70] sm:$0xff] %v345
  %378 = vst [vmem:[%s3 + $0x78] sm:$0xff] %v346
  %379 = vst [vmem:[%s3 + $0x80] sm:$0xff] %v347
  %380 = vst [vmem:[%s3 + $0x88] sm:$0xff] %v348
  %381 = vst [vmem:[%s3 + $0x90] sm:$0xff] %v349
  %382 = vst [vmem:[%s3 + $0x98] sm:$0xff] %v350
  %383 = vst [vmem:[%s3 + $0xa0] sm:$0xff] %v351
  %384 = vst [vmem:[%s3 + $0xa8] sm:$0xff] %v352
  %385 = vst [vmem:[%s3 + $0xb0] sm:$0xff] %v353
  %386 = vst [vmem:[%s3 + $0xb8] sm:$0xff] %v354
  %387 = vst [vmem:[%s3 + $0xc0] sm:$0xff] %v355
  %388 = vst [vmem:[%s3 + $0xc8] sm:$0xff] %v356
  %389 = vst [vmem:[%s3 + $0xd0] sm:$0xff] %v357
  %390 = vst [vmem:[%s3 + $0xd8] sm:$0xff] %v358
  %391 = vst [vmem:[%s3 + $0xe0] sm:$0xff] %v359
  %392 = vst [vmem:[%s3 + $0xe8] sm:$0xff] %v360
  %393 = vst [vmem:[%s3 + $0xf0] sm:$0xff] %v361
  %394 = vst [vmem:[%s3 + $0xf8] sm:$0xff] %v362
  // Predicated region
  $region14: #{relu_layer.1} parent=0 // pred_check
    _
  $region15: #{relu_layer.1} parent=0 // pred_check_branch
    %396 = sbr.rel (0) target = $region17
  $region16: #{relu_layer.1} parent=0 // pred_region
    _
  $region17: #{relu_layer.1} parent=0 // pred_fallthru
    _
  // Predicated region
  $region18: #{relu_layer.1} parent=0 // pred_check
    _
  $region19: #{relu_layer.1} parent=0 // pred_check_branch
    %398 = sbr.rel (0) target = $region21
  $region20: #{relu_layer.1} parent=0 // pred_region
    _
  $region21: #{relu_layer.1} parent=0 // pred_fallthru
    _

</llo_original>
